<compile_context>
chip_gen: v7x
topology: tpu7x:2x2x1
jax: 0.10.0
libtpu: 0.0.40
codegen_flags: <defaults>
</compile_context>

<pallas_src>
import jax
import jax.numpy as jnp
from jax.experimental import pallas as pl
from jax.experimental.pallas import tpu as pltpu


# ----------------------------------------------------------------------------- kernel

def lstm2_kernel(x_ref, wg_ref, bg_ref, wc_ref, vec_ref, out_ref):
    In = x_ref.shape[0] - 2          # systemState rows (Out == In)
    H = wc_ref.shape[1]

    x = x_ref[...]                   # (In+2, TB), batch on lanes
    ss = x[0:In, :]                  # systemState^T                (In, TB)
    si0 = x[In:In + 1, :]            # systemInput columns as rows  (1, TB)
    si1 = x[In + 1:In + 2, :]

    # --- LSTM, one timestep, h0 = c0 = 0 (forget gate dropped: it scales c0 == 0) ---
    # Single fused (3H, In+2) @ (In+2, TB) MXU dot; the 2 zero weight columns kill the
    # systemInput rows.  Row slices at 0/H/2H are sublane-tile aligned (H % 8 == 0).
    # TODO(synk): if this K=In+2 MXU push ever shows in the bundle, it could instead be
    # In+2 VPU broadcast-FMAs (mirroring the systemInput path below).
    gates = jnp.dot(wg_ref[...], x, preferred_element_type=jnp.float32) + bg_ref[...]
    i_g = jax.nn.sigmoid(gates[0:H, :])
    g_g = jnp.tanh(gates[H:2 * H, :])
    o_g = jax.nn.sigmoid(gates[2 * H:3 * H, :])
    h = o_g * jnp.tanh(i_g * g_g)    # (H, TB), lane-dense

    # --- folded lstmFullyConnector + fc head: single (Out, H) @ (H, TB) MXU dot ---
    theta = jnp.dot(wc_ref[...], h, preferred_element_type=jnp.float32)

    vec = vec_ref[...]               # (Out, 4) = [wu0 | wu1 | b_combo | a]
    # systemInput contribution (K=2) as two broadcast FMAs on the VPU, plus folded bias.
    theta = theta + vec[:, 0:1] * si0 + vec[:, 1:2] * si1 + vec[:, 2:3]

    # --- affine residual (requires Out == In, as in the PyTorch module) ---
    out_ref[...] = vec[:, 3:4] * ss + theta


# ----------------------------------------------------------------------------- tiling

_MAX_TB = 8192  # cap on lane-axis batch columns per block: (3H, TB) f32 gate tile ~ 3 MiB


def _num_tensorcores():
    """TensorCores per chip that a 'parallel' grid axis can use."""
    try:
        kind = jax.devices()[0].device_kind.lower()
    except Exception:  # pragma: no cover - defensive, never expected on a real backend
        return 1
    if "v7" in kind:
        return 2                      # v7x: 2 TCs per chip
    if "v4" in kind or "v5p" in kind:
        return 2                      # megacore: 2 TCs behind a "parallel" grid axis
    return 1                          # v5e / v6e: single TC


def _round_up(n, m):
    return ((n + m - 1) // m) * m


def _pick_batch_tile(B, num_cores):
    """Lane-axis batch tile: one block on single-TC chips, ~num_cores blocks otherwise."""
    if num_cores <= 1 and B <= _MAX_TB:
        return B                      # v5e/v6e: single block -> zero per-step overhead
    if num_cores > 1 and B < 2 * 128:
        return B                      # too small to split across cores without huge padding
    n_steps = max(num_cores, pl.cdiv(B, _MAX_TB))
    if num_cores > 1:
        n_steps = _round_up(n_steps, num_cores)   # balanced across cores
    return min(_round_up(pl.cdiv(B, n_steps), 128), _MAX_TB)


# ----------------------------------------------------------------------------- wrapper

def fold_params(params):
    """One-time weight folding into 4 kernel-ready tensors (run outside the hot path)."""
    In = params["w_ih"].shape[1]
    H = params["w_ih"].shape[0] // 4
    Out = params["w_fc"].shape[0]
    assert Out == In, "LSTM2 residual `a * systemState + thetaY` requires outputSize == inputSize"

    w_ih = params["w_ih"]                                  # (4H, In); PyTorch rows: [i|f|g|o]
    b = params["b_ih"] + params["b_hh"]                    # (4H,)
    # Forget gate omitted (it multiplies c0 == 0).  Two zero columns let the gate dot
    # consume the full (In+2, TB) activation block directly (systemInput rows are killed).
    w_gates = jnp.concatenate([w_ih[0:H], w_ih[2 * H:3 * H], w_ih[3 * H:4 * H]], axis=0)
    w_gates = jnp.pad(w_gates, ((0, 0), (0, 2)))           # (3H, In+2)
    b_gates = jnp.concatenate([b[0:H], b[2 * H:3 * H], b[3 * H:4 * H]]).reshape(3 * H, 1)

    w_fc = params["w_fc"]                                  # (Out, In+3)
    wfc1 = w_fc[:, :In]                                    # (Out, In)
    w_combo = wfc1 @ params["w_lc"]                        # (Out, H) == (W_lc^T @ W_fc1^T)^T
    b_combo = params["b_fc"] + w_fc[:, In + 2] + wfc1 @ params["b_lc"]   # (Out,)
    vecs = jnp.stack([w_fc[:, In], w_fc[:, In + 1], b_combo,
                      params["a"].reshape(-1)], axis=1)    # (Out, 4)

    return {"w_gates": w_gates, "b_gates": b_gates, "w_combo": w_combo, "vecs": vecs}


def lstm2_forward(x, folded, transposed_output=False):
    """x: (B, inputSize+2) float32.  folded: output of fold_params().

    Returns (B, Out), or (Out, B) when transposed_output=True (lets the consumer skip the
    final relayout entirely)."""
    B = x.shape[0]
    In = folded["w_gates"].shape[1] - 2
    H = folded["w_combo"].shape[1]
    Out = folded["w_combo"].shape[0]

    xT = x.T                                               # single activation relayout (In+2, B)

    TB = _pick_batch_tile(B, _num_tensorcores())
    grid_n = pl.cdiv(B, TB)
    Bp = TB * grid_n
    if Bp != B:
        xT = jnp.pad(xT, ((0, 0), (0, Bp - B)))            # padded columns dropped below

    act_blk = lambda rows: pl.BlockSpec((rows, TB), lambda i: (0, i))   # batch-tiled on lanes
    # Constant index_map -> each weight block is DMA'd once and stays VMEM-resident.
    # TODO(synk): pipeline_mode=pl.Buffered(1) would also drop their (idle) second buffer;
    # omitted to stay on the widest-supported lowering path.
    resident = lambda shape: pl.BlockSpec(shape, lambda i: (0, 0))

    out_t = pl.pallas_call(
        lstm2_kernel,
        out_shape=jax.ShapeDtypeStruct((Out, Bp), jnp.float32),
        grid=(grid_n,),
        in_specs=[
            act_blk(In + 2),                 # x^T  (systemState | systemInput rows)
            resident((3 * H, In + 2)),       # fused gate weights (i|g|o), zero-padded cols
            resident((3 * H, 1)),            # fused gate biases
            resident((Out, H)),              # folded W_fc1 @ W_lc
            resident((Out, 4)),              # [wu0 | wu1 | b_combo | a]
        ],
        out_specs=act_blk(Out),
        compiler_params=pltpu.CompilerParams(dimension_semantics=("parallel",)),
    )(xT, folded["w_gates"], folded["b_gates"], folded["w_combo"], folded["vecs"])

    if Bp != B:
        out_t = out_t[:, :B]
    return out_t if transposed_output else out_t.T


# ----------------------------------------------------------------------------- reference

def lstm2_reference(x, params):
    """Pure-JAX reference of the PyTorch forward (for verification)."""
    In = params["w_ih"].shape[1]
    H = params["w_ih"].shape[0] // 4
    ss = x[:, :-2]
    si = x[:, -2:]
    gates = ss @ params["w_ih"].T + params["b_ih"] + params["b_hh"]
    i = jax.nn.sigmoid(gates[:, :H])
    f = jax.nn.sigmoid(gates[:, H:2 * H])                  # multiplies c0 == 0
    g = jnp.tanh(gates[:, 2 * H:3 * H])
    o = jax.nn.sigmoid(gates[:, 3 * H:])
    c = i * g + f * 0.0
    h = o * jnp.tanh(c)
    lstm_out = h @ params["w_lc"].T + params["b_lc"]
    y = jnp.concatenate([lstm_out, si, jnp.ones((x.shape[0], 1), x.dtype)], axis=1)
    theta = y @ params["w_fc"].T + params["b_fc"]
    return params["a"] * ss + theta


def init_params(key, input_size, hidden_size, output_size, full_state_size):
    ks = jax.random.split(key, 8)
    s = 0.1
    return {
        "w_ih": s * jax.random.normal(ks[0], (4 * hidden_size, input_size), jnp.float32),
        "b_ih": s * jax.random.normal(ks[1], (4 * hidden_size,), jnp.float32),
        "b_hh": s * jax.random.normal(ks[2], (4 * hidden_size,), jnp.float32),
        # W_hh (4H, H) exists in nn.LSTM but multiplies h0 == 0, so it never affects the output.
        "w_lc": s * jax.random.normal(ks[3], (input_size, hidden_size), jnp.float32),
        "b_lc": s * jax.random.normal(ks[4], (input_size,), jnp.float32),
        "w_fc": s * jax.random.normal(ks[5], (output_size, full_state_size), jnp.float32),
        "b_fc": s * jax.random.normal(ks[6], (output_size,), jnp.float32),
        "a": jax.random.normal(ks[7], (1, input_size), jnp.float32),
    }


if __name__ == "__main__":
    # Shapes consistent with the module's forward-pass constraints:
    #   numLayer == 1, outputSize == inputSize, fullStateSize == inputSize + 3,
    #   seq_len == batchSize.
    input_size, hidden_size, output_size = 4, 32, 4
    full_state_size = input_size + 3

    key = jax.random.PRNGKey(0)
    kx1, kx2, kx3, kp = jax.random.split(key, 4)
    params = init_params(kp, input_size, hidden_size, output_size, full_state_size)
    folded = fold_params(params)     # one-time weight folding (outside the hot path)

    # B=8   : single full-extent block on every generation.
    # B=1000: single block on v5e/v6e; two 512-column blocks (+24 padded cols) on v7x.
    # B=1024: single block on v5e/v6e; two 512-column blocks, no padding, on v7x.
    for kx, batch in ((kx1, 8), (kx2, 1000), (kx3, 1024)):
        x = jax.random.normal(kx, (batch, input_size + 2), jnp.float32)
        out = jax.block_until_ready(lstm2_forward(x, folded))
        ref = jax.block_until_ready(lstm2_reference(x, params))
        assert out.shape == (batch, output_size)
        assert jnp.allclose(out, ref, atol=1e-4, rtol=1e-4), f"mismatch vs reference (B={batch})"

    print("KERNEL_OK")
</pallas_src>

<mosaic_0001>
module attributes {stable_mosaic.version = 11 : i64} {
  func.func @lstm2_kernel(%arg0: i32, %arg1: memref<6x8xf32, #tpu.memory_space<vmem>>, %arg2: memref<96x6xf32, #tpu.memory_space<vmem>>, %arg3: memref<96x1xf32, #tpu.memory_space<vmem>>, %arg4: memref<4x32xf32, #tpu.memory_space<vmem>>, %arg5: memref<4x4xf32, #tpu.memory_space<vmem>>, %arg6: memref<4x8xf32, #tpu.memory_space<vmem>>) attributes {dimension_semantics = [#tpu.dimension_semantics<parallel>], iteration_bounds = array<i64: 1>, scalar_prefetch = 0 : i64, scratch_operands = 0 : i64, tpu.core_type = #tpu.core_type<tc>, window_params = [{transform_indices = @transform_0, window_bounds = array<i64: 6, 8>}, {pipeline_mode = #tpu.pipeline_mode<synchronous>, transform_indices = @transform_1, window_bounds = array<i64: 96, 6>}, {pipeline_mode = #tpu.pipeline_mode<synchronous>, transform_indices = @transform_2, window_bounds = array<i64: 96, 1>}, {pipeline_mode = #tpu.pipeline_mode<synchronous>, transform_indices = @transform_3, window_bounds = array<i64: 4, 32>}, {pipeline_mode = #tpu.pipeline_mode<synchronous>, transform_indices = @transform_4, window_bounds = array<i64: 4, 4>}, {transform_indices = @transform_5, window_bounds = array<i64: 4, 8>}]} {
    %c0 = arith.constant 0 : index
    %c0_0 = arith.constant 0 : index
    %0 = vector.load %arg1[%c0, %c0_0] : memref<6x8xf32, #tpu.memory_space<vmem>>, vector<6x8xf32>
    %1 = vector.extract_strided_slice %0 {offsets = [0, 0], sizes = [4, 8], strides = [1, 1]} : vector<6x8xf32> to vector<4x8xf32>
    %2 = vector.extract_strided_slice %0 {offsets = [4, 0], sizes = [1, 8], strides = [1, 1]} : vector<6x8xf32> to vector<1x8xf32>
    %3 = vector.extract_strided_slice %0 {offsets = [5, 0], sizes = [1, 8], strides = [1, 1]} : vector<6x8xf32> to vector<1x8xf32>
    %c0_1 = arith.constant 0 : index
    %c0_2 = arith.constant 0 : index
    %4 = vector.load %arg2[%c0_1, %c0_2] : memref<96x6xf32, #tpu.memory_space<vmem>>, vector<96x6xf32>
    %cst = arith.constant dense<0.000000e+00> : vector<96x8xf32>
    %5 = tpu.matmul %4, %0, %cst {dimension_numbers = #tpu.dot_dimension_numbers<[1], [0], [0], [1], [0, 0, 1, 1], [], []>} : vector<96x6xf32>, vector<6x8xf32>, vector<96x8xf32> -> vector<96x8xf32>
    %c0_3 = arith.constant 0 : index
    %c0_4 = arith.constant 0 : index
    %6 = vector.load %arg3[%c0_3, %c0_4] : memref<96x1xf32, #tpu.memory_space<vmem>>, vector<96x1xf32>
    %7 = vector.broadcast %6 : vector<96x1xf32> to vector<96x8xf32>
    %8 = arith.addf %5, %7 : vector<96x8xf32>
    %9 = vector.extract_strided_slice %8 {offsets = [0, 0], sizes = [32, 8], strides = [1, 1]} : vector<96x8xf32> to vector<32x8xf32>
    %10 = arith.negf %9 : vector<32x8xf32>
    %11 = math.exp %10 : vector<32x8xf32>
    %cst_5 = arith.constant 1.000000e+00 : f32
    %12 = vector.broadcast %cst_5 : f32 to vector<32x8xf32>
    %13 = arith.addf %12, %11 : vector<32x8xf32>
    %14 = arith.divf %12, %13 : vector<32x8xf32>
    %15 = vector.extract_strided_slice %8 {offsets = [32, 0], sizes = [32, 8], strides = [1, 1]} : vector<96x8xf32> to vector<32x8xf32>
    %16 = math.tanh %15 : vector<32x8xf32>
    %17 = vector.extract_strided_slice %8 {offsets = [64, 0], sizes = [32, 8], strides = [1, 1]} : vector<96x8xf32> to vector<32x8xf32>
    %18 = arith.negf %17 : vector<32x8xf32>
    %19 = math.exp %18 : vector<32x8xf32>
    %cst_6 = arith.constant 1.000000e+00 : f32
    %20 = vector.broadcast %cst_6 : f32 to vector<32x8xf32>
    %21 = arith.addf %20, %19 : vector<32x8xf32>
    %22 = arith.divf %20, %21 : vector<32x8xf32>
    %23 = arith.mulf %14, %16 : vector<32x8xf32>
    %24 = math.tanh %23 : vector<32x8xf32>
    %25 = arith.mulf %22, %24 : vector<32x8xf32>
    %c0_7 = arith.constant 0 : index
    %c0_8 = arith.constant 0 : index
    %26 = vector.load %arg4[%c0_7, %c0_8] : memref<4x32xf32, #tpu.memory_space<vmem>>, vector<4x32xf32>
    %cst_9 = arith.constant dense<0.000000e+00> : vector<4x8xf32>
    %27 = tpu.matmul %26, %25, %cst_9 {dimension_numbers = #tpu.dot_dimension_numbers<[1], [0], [0], [1], [0, 0, 1, 1], [], []>} : vector<4x32xf32>, vector<32x8xf32>, vector<4x8xf32> -> vector<4x8xf32>
    %c0_10 = arith.constant 0 : index
    %c0_11 = arith.constant 0 : index
    %28 = vector.load %arg5[%c0_10, %c0_11] : memref<4x4xf32, #tpu.memory_space<vmem>>, vector<4x4xf32>
    %29 = vector.extract_strided_slice %28 {offsets = [0, 0], sizes = [4, 1], strides = [1, 1]} : vector<4x4xf32> to vector<4x1xf32>
    %30 = vector.broadcast %29 : vector<4x1xf32> to vector<4x8xf32>
    %31 = vector.broadcast %2 : vector<1x8xf32> to vector<4x8xf32>
    %32 = arith.mulf %30, %31 : vector<4x8xf32>
    %33 = arith.addf %27, %32 : vector<4x8xf32>
    %34 = vector.extract_strided_slice %28 {offsets = [0, 1], sizes = [4, 1], strides = [1, 1]} : vector<4x4xf32> to vector<4x1xf32>
    %35 = vector.broadcast %34 : vector<4x1xf32> to vector<4x8xf32>
    %36 = vector.broadcast %3 : vector<1x8xf32> to vector<4x8xf32>
    %37 = arith.mulf %35, %36 : vector<4x8xf32>
    %38 = arith.addf %33, %37 : vector<4x8xf32>
    %39 = vector.extract_strided_slice %28 {offsets = [0, 2], sizes = [4, 1], strides = [1, 1]} : vector<4x4xf32> to vector<4x1xf32>
    %40 = vector.broadcast %39 : vector<4x1xf32> to vector<4x8xf32>
    %41 = arith.addf %38, %40 : vector<4x8xf32>
    %42 = vector.extract_strided_slice %28 {offsets = [0, 3], sizes = [4, 1], strides = [1, 1]} : vector<4x4xf32> to vector<4x1xf32>
    %43 = vector.broadcast %42 : vector<4x1xf32> to vector<4x8xf32>
    %44 = arith.mulf %43, %1 : vector<4x8xf32>
    %45 = arith.addf %44, %41 : vector<4x8xf32>
    %c0_12 = arith.constant 0 : index
    %c0_13 = arith.constant 0 : index
    %46 = vector.load %arg6[%c0_12, %c0_13] : memref<4x8xf32, #tpu.memory_space<vmem>>, vector<4x8xf32>
    tpu.vector_store %arg6[%c0_12, %c0_13], %45 {strides = array<i32>} : memref<4x8xf32, #tpu.memory_space<vmem>>, vector<4x8xf32>,
    return
  }
  func.func @transform_0(%arg0: i32) -> (i32, i32) {
    %c0_i32 = arith.constant 0 : i32
    %c0_i32_0 = arith.constant 0 : i32
    return %c0_i32, %arg0 : i32, i32
  }
  func.func @transform_1(%arg0: i32) -> (i32, i32) {
    %c0_i32 = arith.constant 0 : i32
    %c0_i32_0 = arith.constant 0 : i32
    %c0_i32_1 = arith.constant 0 : i32
    return %c0_i32, %c0_i32_0 : i32, i32
  }
  func.func @transform_2(%arg0: i32) -> (i32, i32) {
    %c0_i32 = arith.constant 0 : i32
    %c0_i32_0 = arith.constant 0 : i32
    %c0_i32_1 = arith.constant 0 : i32
    return %c0_i32, %c0_i32_0 : i32, i32
  }
  func.func @transform_3(%arg0: i32) -> (i32, i32) {
    %c0_i32 = arith.constant 0 : i32
    %c0_i32_0 = arith.constant 0 : i32
    %c0_i32_1 = arith.constant 0 : i32
    return %c0_i32, %c0_i32_0 : i32, i32
  }
  func.func @transform_4(%arg0: i32) -> (i32, i32) {
    %c0_i32 = arith.constant 0 : i32
    %c0_i32_0 = arith.constant 0 : i32
    %c0_i32_1 = arith.constant 0 : i32
    return %c0_i32, %c0_i32_0 : i32, i32
  }
  func.func @transform_5(%arg0: i32) -> (i32, i32) {
    %c0_i32 = arith.constant 0 : i32
    %c0_i32_0 = arith.constant 0 : i32
    return %c0_i32, %arg0 : i32, i32
  }
}

</mosaic_0001>

<llo_original>
// kernel: tpu_custom_call.1
$region0: #{tpu_custom_call.1}
  #allocation0 [shape = 'u32[]', space=smem, size = 0x4, offset = 0x4, fixed_abs, tag = 'smem constant byte address 0x4 - core index']
  #allocation1 [shape = 'u32[144,128]{1,0:T(1,128)}', space=vmem, size = 0x12000, scoped, tag = 'internal scratch']
  %s0 = inlined_call_operand.vmem [shape: f32[6,8], index: 0, kind: input, shape index: {}]
  %s1 = inlined_call_operand.vmem [shape: f32[96,6], index: 1, kind: input, shape index: {}]
  %s2 = inlined_call_operand.vmem [shape: f32[96,1], index: 2, kind: input, shape index: {}]
  %s3 = inlined_call_operand.vmem [shape: f32[4,32], index: 3, kind: input, shape index: {}]
  %s4 = inlined_call_operand.vmem [shape: f32[4,4], index: 4, kind: input, shape index: {}]
  %s5 = inlined_call_operand.hbm [shape: f32[4,8], index: 5, kind: output, shape index: {}]
  %s6 = sld [smem:[#allocation0]]
  $region30: #{tpu_custom_call.1} parent=0
    _
  %s8 = ssub.s32 1, %s6
  %s9 = scalar_select 0, %s8, %s6
  $region1: #{tpu_custom_call.1} parent=0
    #allocation2 [shape = 'u8[2048]{0}', space=vmem, size = 0x800, scoped, tag = 'output window, operand 0, single buffered']
    #allocation3 [shape = 's32[1]{0}', space=sflag, size = 0x4, scoped, tag = 'scoped memory for tpu_custom_call.1']
    %10 = vsyncpa [#allocation3], 0
    // Predicated region
    $region2: #{tpu_custom_call.1} parent=1 // pred_check
      _
    $region3: #{tpu_custom_call.1} parent=1 // pred_check_branch
      %12 = sbr.rel (0) target = $region5
    $region4: #{tpu_custom_call.1} parent=1 // pred_region
      _
    $region5: #{tpu_custom_call.1} parent=1 // pred_fallthru
      _
    // Predicated region
    $region6: #{tpu_custom_call.1} parent=1 // pred_check
      _
    $region7: #{tpu_custom_call.1} parent=1 // pred_check_branch
      %14 = sbr.rel (0) target = $region9
    $region8: #{tpu_custom_call.1} parent=1 // pred_region
      _
    $region9: #{tpu_custom_call.1} parent=1 // pred_fallthru
      _
    // Predicated region
    $region10: #{tpu_custom_call.1} parent=1 // pred_check
      _
    $region11: #{tpu_custom_call.1} parent=1 // pred_check_branch
      %16 = sbr.rel (0) target = $region13
    $region12: #{tpu_custom_call.1} parent=1 // pred_region
      _
    $region13: #{tpu_custom_call.1} parent=1 // pred_fallthru
      _
    // Predicated region
    $region14: #{tpu_custom_call.1} parent=1 // pred_check
      _
    $region15: #{tpu_custom_call.1} parent=1 // pred_check_branch
      %18 = sbr.rel (0) target = $region17
    $region16: #{tpu_custom_call.1} parent=1 // pred_region
      _
    $region17: #{tpu_custom_call.1} parent=1 // pred_fallthru
      _
    // Predicated region
    $region18: #{tpu_custom_call.1} parent=1 // pred_check
      _
    $region19: #{tpu_custom_call.1} parent=1 // pred_check_branch
      %20 = sbr.rel (0) target = $region21
    $region20: #{tpu_custom_call.1} parent=1 // pred_region
      _
    $region21: #{tpu_custom_call.1} parent=1 // pred_fallthru
      _
    %v21 = vld [vmem:[%s0] sm:$0x3f]
    %v22 = vld [vmem:[%s1] sm:$0xff]
    %v23 = vld [vmem:[%s1 + $0x8] sm:$0xff]
    %v24 = vld [vmem:[%s1 + $0x10] sm:$0xff]
    %v25 = vld [vmem:[%s1 + $0x18] sm:$0xff]
    %v26 = vld [vmem:[%s1 + $0x20] sm:$0xff]
    %v27 = vld [vmem:[%s1 + $0x28] sm:$0xff]
    %v28 = vld [vmem:[%s1 + $0x30] sm:$0xff]
    %v29 = vld [vmem:[%s1 + $0x38] sm:$0xff]
    %v30 = vld [vmem:[%s1 + $0x40] sm:$0xff]
    %v31 = vld [vmem:[%s1 + $0x48] sm:$0xff]
    %v32 = vld [vmem:[%s1 + $0x50] sm:$0xff]
    %v33 = vld [vmem:[%s1 + $0x58] sm:$0xff]
    %v34 = vld [vmem:[%s2] sm:$0xff]
    %v35 = vld [vmem:[%s2 + $0x8] sm:$0xff]
    %v36 = vld [vmem:[%s2 + $0x10] sm:$0xff]
    %v37 = vld [vmem:[%s2 + $0x18] sm:$0xff]
    %v38 = vld [vmem:[%s2 + $0x20] sm:$0xff]
    %v39 = vld [vmem:[%s2 + $0x28] sm:$0xff]
    %v40 = vld [vmem:[%s2 + $0x30] sm:$0xff]
    %v41 = vld [vmem:[%s2 + $0x38] sm:$0xff]
    %v42 = vld [vmem:[%s2 + $0x40] sm:$0xff]
    %v43 = vld [vmem:[%s2 + $0x48] sm:$0xff]
    %v44 = vld [vmem:[%s2 + $0x50] sm:$0xff]
    %v45 = vld [vmem:[%s2 + $0x58] sm:$0xff]
    %47 = vset.pattern.permute.xlu0 0
    %48 = vperm.xlu0 %47, %v34
    %v49 = vpop.permute.xlu0 %48
    %52 = vset.pattern.permute.xlu0 0
    %53 = vperm.xlu0 %52, %v35
    %v54 = vpop.permute.xlu0 %53
    %57 = vset.pattern.permute.xlu0 0
    %58 = vperm.xlu0 %57, %v36
    %v59 = vpop.permute.xlu0 %58
    %62 = vset.pattern.permute.xlu0 0
    %63 = vperm.xlu0 %62, %v37
    %v64 = vpop.permute.xlu0 %63
    %67 = vset.pattern.permute.xlu0 0
    %68 = vperm.xlu0 %67, %v38
    %v69 = vpop.permute.xlu0 %68
    %72 = vset.pattern.permute.xlu0 0
    %73 = vperm.xlu0 %72, %v39
    %v74 = vpop.permute.xlu0 %73
    %77 = vset.pattern.permute.xlu0 0
    %78 = vperm.xlu0 %77, %v40
    %v79 = vpop.permute.xlu0 %78
    %82 = vset.pattern.permute.xlu0 0
    %83 = vperm.xlu0 %82, %v41
    %v84 = vpop.permute.xlu0 %83
    %87 = vset.pattern.permute.xlu0 0
    %88 = vperm.xlu0 %87, %v42
    %v89 = vpop.permute.xlu0 %88
    %92 = vset.pattern.permute.xlu0 0
    %93 = vperm.xlu0 %92, %v43
    %v94 = vpop.permute.xlu0 %93
    %97 = vset.pattern.permute.xlu0 0
    %98 = vperm.xlu0 %97, %v44
    %v99 = vpop.permute.xlu0 %98
    %102 = vset.pattern.permute.xlu0 0
    %103 = vperm.xlu0 %102, %v45
    %v104 = vpop.permute.xlu0 %103
    %vm106 = vcmask 48128
    %v108 = vsel %vm106, %v22, 0
    %v111 = vsel %vm106, %v23, 0
    %v114 = vsel %vm106, %v24, 0
    %v117 = vsel %vm106, %v25, 0
    %v120 = vsel %vm106, %v26, 0
    %v123 = vsel %vm106, %v27, 0
    %v126 = vsel %vm106, %v28, 0
    %v129 = vsel %vm106, %v29, 0
    %v132 = vsel %vm106, %v30, 0
    %v135 = vsel %vm106, %v31, 0
    %v138 = vsel %vm106, %v32, 0
    %v141 = vsel %vm106, %v33, 0
    %vm143 = vcmask 1045504
    %v145 = vsel %vm143, %v21, 0
    %147 = vmatprep.subr.mxu0 0.0
    %148 = vmatpush1.msra.mxu0 %v145
    %149 = vmatprep.subr.mxu0 0.0
    %150 = vmatpush1.msra.mxu0 0.0
    %151 = vmatprep.subr.mxu0 0.0
    %152 = vmatpush1.msra.mxu0 0.0
    %153 = vmatprep.subr.mxu0 0.0
    %154 = vmatpush1.msra.mxu0 0.0
    %155 = vmatprep.subr.mxu0 0.0
    %156 = vmatpush1.msra.mxu0 0.0
    %157 = vmatprep.subr.mxu0 0.0
    %158 = vmatpush1.msra.mxu0 0.0
    %159 = vmatprep.subr.mxu0 0.0
    %160 = vmatpush1.msra.mxu0 0.0
    %161 = vmatprep.subr.mxu0 0.0
    %162 = vmatpush1.msra.mxu0 0.0
    %163 = vmatprep.subr.mxu0 0.0
    %164 = vmatpush1.msra.mxu0 0.0
    %165 = vmatprep.subr.mxu0 0.0
    %166 = vmatpush1.msra.mxu0 0.0
    %167 = vmatprep.subr.mxu0 0.0
    %168 = vmatpush1.msra.mxu0 0.0
    %169 = vmatprep.subr.mxu0 0.0
    %170 = vmatpush1.msra.mxu0 0.0
    %171 = vmatprep.subr.mxu0 0.0
    %172 = vmatpush1.msra.mxu0 0.0
    %173 = vmatprep.subr.mxu0 0.0
    %174 = vmatpush1.msra.mxu0 0.0
    %175 = vmatprep.subr.mxu0 0.0
    %176 = vmatpush1.msra.mxu0 0.0
    %177 = vmatprep.subr.mxu0 0.0
    %178 = vmatpush1.msra.mxu0 0.0
    %179 = vmatprep.subr.mxu0 0.0
    %180 = vmatpush1.msra.mxu0 0.0
    %181 = vmatprep.subr.mxu0 0.0
    %182 = vmatpush1.msra.mxu0 0.0
    %183 = vmatprep.subr.mxu0 0.0
    %184 = vmatpush1.msra.mxu0 0.0
    %185 = vmatprep.subr.mxu0 0.0
    %186 = vmatpush1.msra.mxu0 0.0
    %187 = vmatprep.subr.mxu0 0.0
    %188 = vmatpush1.msra.mxu0 0.0
    %189 = vmatprep.subr.mxu0 0.0
    %190 = vmatpush1.msra.mxu0 0.0
    %191 = vmatprep.subr.mxu0 0.0
    %192 = vmatpush1.msra.mxu0 0.0
    %193 = vmatprep.subr.mxu0 0.0
    %194 = vmatpush1.msra.mxu0 0.0
    %195 = vmatprep.subr.mxu0 0.0
    %196 = vmatpush1.msra.mxu0 0.0
    %197 = vmatprep.subr.mxu0 0.0
    %198 = vmatpush1.msra.mxu0 0.0
    %199 = vmatprep.subr.mxu0 0.0
    %200 = vmatpush1.msra.mxu0 0.0
    %201 = vmatprep.subr.mxu0 0.0
    %202 = vmatpush1.msra.mxu0 0.0
    %203 = vmatprep.subr.mxu0 0.0
    %204 = vmatpush1.msra.mxu0 0.0
    %205 = vmatprep.subr.mxu0 0.0
    %206 = vmatpush1.msra.mxu0 0.0
    %207 = vmatprep.subr.mxu0 0.0
    %208 = vmatpush1.msra.mxu0 0.0
    %209 = vmatprep.subr.mxu0 0.0
    %210 = vmatpush1.msra.mxu0 0.0
    %211 = vmatprep.mubr.f32.mxu0 0.0
    %212 = vmatmul.mubr.f32.gmra.mrb[0].mxu0 %v108
    %v213 = vpop.f32.mrb[0].mxu0
    %v214 = vadd.f32 %v49, %v213
    %v215 = vpop.f32.mrb[0].mxu0
    %216 = vmatprep.mubr.f32.mxu0 0.0
    %217 = vmatmul.mubr.f32.gmra.mrb[0].mxu0 %v111
    %v218 = vpop.f32.mrb[0].mxu0
    %v219 = vadd.f32 %v54, %v218
    %v220 = vpop.f32.mrb[0].mxu0
    %221 = vmatprep.mubr.f32.mxu0 0.0
    %222 = vmatmul.mubr.f32.gmra.mrb[0].mxu0 %v114
    %v223 = vpop.f32.mrb[0].mxu0
    %v224 = vadd.f32 %v59, %v223
    %v225 = vpop.f32.mrb[0].mxu0
    %226 = vmatprep.mubr.f32.mxu0 0.0
    %227 = vmatmul.mubr.f32.gmra.mrb[0].mxu0 %v117
    %v228 = vpop.f32.mrb[0].mxu0
    %v229 = vadd.f32 %v64, %v228
    %v230 = vpop.f32.mrb[0].mxu0
    %231 = vmatprep.mubr.f32.mxu0 0.0
    %232 = vmatmul.mubr.f32.gmra.mrb[0].mxu0 %v120
    %v233 = vpop.f32.mrb[0].mxu0
    %v234 = vadd.f32 %v69, %v233
    %v235 = vpop.f32.mrb[0].mxu0
    %236 = vmatprep.mubr.f32.mxu0 0.0
    %237 = vmatmul.mubr.f32.gmra.mrb[0].mxu0 %v123
    %v238 = vpop.f32.mrb[0].mxu0
    %v239 = vadd.f32 %v74, %v238
    %v240 = vpop.f32.mrb[0].mxu0
    %241 = vmatprep.mubr.f32.mxu0 0.0
    %242 = vmatmul.mubr.f32.gmra.mrb[0].mxu0 %v126
    %v243 = vpop.f32.mrb[0].mxu0
    %v244 = vadd.f32 %v79, %v243
    %v245 = vpop.f32.mrb[0].mxu0
    %246 = vmatprep.mubr.f32.mxu0 0.0
    %247 = vmatmul.mubr.f32.gmra.mrb[0].mxu0 %v129
    %v248 = vpop.f32.mrb[0].mxu0
    %v249 = vadd.f32 %v84, %v248
    %v250 = vpop.f32.mrb[0].mxu0
    %251 = vmatprep.mubr.f32.mxu0 0.0
    %252 = vmatmul.mubr.f32.gmra.mrb[0].mxu0 %v132
    %v253 = vpop.f32.mrb[0].mxu0
    %v254 = vadd.f32 %v89, %v253
    %v255 = vpop.f32.mrb[0].mxu0
    %256 = vmatprep.mubr.f32.mxu0 0.0
    %257 = vmatmul.mubr.f32.gmra.mrb[0].mxu0 %v135
    %v258 = vpop.f32.mrb[0].mxu0
    %v259 = vadd.f32 %v94, %v258
    %v260 = vpop.f32.mrb[0].mxu0
    %261 = vmatprep.mubr.f32.mxu0 0.0
    %262 = vmatmul.mubr.f32.gmra.mrb[0].mxu0 %v138
    %v263 = vpop.f32.mrb[0].mxu0
    %v264 = vadd.f32 %v99, %v263
    %v265 = vpop.f32.mrb[0].mxu0
    %266 = vmatprep.mubr.f32.mxu0 0.0
    %267 = vmatmul.mubr.f32.gmra.mrb[0].mxu0 %v141
    %v268 = vpop.f32.mrb[0].mxu0
    %v269 = vadd.f32 %v104, %v268
    %v270 = vpop.f32.mrb[0].mxu0
    %271 = vdwg.mxu0
    %v272 = vxor.u32 %v214, 2147483648
    %v273 = vxor.u32 %v219, 2147483648
    %v274 = vxor.u32 %v224, 2147483648
    %v275 = vxor.u32 %v229, 2147483648
    %v276 = vmul.f32 %v272, 1.442695
    %v277 = vpow.pop %v276
    %v278 = vmul.f32 %v273, 1.442695
    %v279 = vpow.pop %v278
    %v280 = vmul.f32 %v274, 1.442695
    %v281 = vpow.pop %v280
    %v282 = vmul.f32 %v275, 1.442695
    %v283 = vpow.pop %v282
    %v284 = vadd.f32 %v277, 1.0
    %v285 = vadd.f32 %v279, 1.0
    %v286 = vadd.f32 %v281, 1.0
    %v287 = vadd.f32 %v283, 1.0
    %v288 = vrcp.pop %v284
    %v289 = vmul.f32 1.0, %v288
    %v290 = vrcp.pop %v285
    %v291 = vmul.f32 1.0, %v290
    %v292 = vrcp.pop %v286
    %v293 = vmul.f32 1.0, %v292
    %v294 = vrcp.pop %v287
    %v295 = vmul.f32 1.0, %v294
    %v296 = vtanh.pop %v234
    %v297 = vtanh.pop %v239
    %v298 = vtanh.pop %v244
    %v299 = vtanh.pop %v249
    %v300 = vxor.u32 %v254, 2147483648
    %v301 = vxor.u32 %v259, 2147483648
    %v302 = vxor.u32 %v264, 2147483648
    %v303 = vxor.u32 %v269, 2147483648
    %v304 = vmul.f32 %v300, 1.442695
    %v305 = vpow.pop %v304
    %v306 = vmul.f32 %v301, 1.442695
    %v307 = vpow.pop %v306
    %v308 = vmul.f32 %v302, 1.442695
    %v309 = vpow.pop %v308
    %v310 = vmul.f32 %v303, 1.442695
    %v311 = vpow.pop %v310
    %v312 = vadd.f32 %v305, 1.0
    %v313 = vadd.f32 %v307, 1.0
    %v314 = vadd.f32 %v309, 1.0
    %v315 = vadd.f32 %v311, 1.0
    %v316 = vrcp.pop %v312
    %v317 = vmul.f32 1.0, %v316
    %v318 = vrcp.pop %v313
    %v319 = vmul.f32 1.0, %v318
    %v320 = vrcp.pop %v314
    %v321 = vmul.f32 1.0, %v320
    %v322 = vrcp.pop %v315
    %v323 = vmul.f32 1.0, %v322
    %v324 = vmul.f32 %v289, %v296
    %v325 = vmul.f32 %v291, %v297
    %v326 = vmul.f32 %v293, %v298
    %v327 = vmul.f32 %v295, %v299
    %v328 = vtanh.pop %v324
    %v329 = vtanh.pop %v325
    %v330 = vtanh.pop %v326
    %v331 = vtanh.pop %v327
    %v332 = vmul.f32 %v317, %v328
    %v333 = vmul.f32 %v319, %v329
    %v334 = vmul.f32 %v321, %v330
    %v335 = vmul.f32 %v323, %v331
    %v336 = vld [vmem:[%s3] sm:$0xf]
    %v337 = vld [vmem:[%s4] sm:$0xf]
    %339 = vset.pattern.permute.xlu0 0
    %340 = vperm.xlu0 %339, %v337
    %v341 = vpop.permute.xlu0 %340
    %v343 = vlaneseq
    %v344 = vshrl.u32 %v343, 7
    %v345 = vsub.s32 4, %v344
    %v346 = vrot.slane %v21, %v345
    %v347 = vmul.f32 %v341, %v346
    %vm348 = vcmask 261120
    %v350 = vsel %vm348, %v336, 0
    %352 = vmatprep.subr.mxu0 0.0
    %353 = vmatpush1.msra.mxu0 %v332
    %354 = vmatprep.subr.mxu0 0.0
    %355 = vmatpush1.msra.mxu0 %v333
    %356 = vmatprep.subr.mxu0 0.0
    %357 = vmatpush1.msra.mxu0 %v334
    %358 = vmatprep.subr.mxu0 0.0
    %359 = vmatpush1.msra.mxu0 %v335
    %360 = vmatprep.subr.mxu0 0.0
    %361 = vmatpush1.msra.mxu0 0.0
    %362 = vmatprep.subr.mxu0 0.0
    %363 = vmatpush1.msra.mxu0 0.0
    %364 = vmatprep.subr.mxu0 0.0
    %365 = vmatpush1.msra.mxu0 0.0
    %366 = vmatprep.subr.mxu0 0.0
    %367 = vmatpush1.msra.mxu0 0.0
    %368 = vmatprep.subr.mxu0 0.0
    %369 = vmatpush1.msra.mxu0 0.0
    %370 = vmatprep.subr.mxu0 0.0
    %371 = vmatpush1.msra.mxu0 0.0
    %372 = vmatprep.subr.mxu0 0.0
    %373 = vmatpush1.msra.mxu0 0.0
    %374 = vmatprep.subr.mxu0 0.0
    %375 = vmatpush1.msra.mxu0 0.0
    %376 = vmatprep.subr.mxu0 0.0
    %377 = vmatpush1.msra.mxu0 0.0
    %378 = vmatprep.subr.mxu0 0.0
    %379 = vmatpush1.msra.mxu0 0.0
    %380 = vmatprep.subr.mxu0 0.0
    %381 = vmatpush1.msra.mxu0 0.0
    %382 = vmatprep.subr.mxu0 0.0
    %383 = vmatpush1.msra.mxu0 0.0
    %384 = vmatprep.subr.mxu0 0.0
    %385 = vmatpush1.msra.mxu0 0.0
    %386 = vmatprep.subr.mxu0 0.0
    %387 = vmatpush1.msra.mxu0 0.0
    %388 = vmatprep.subr.mxu0 0.0
    %389 = vmatpush1.msra.mxu0 0.0
    %390 = vmatprep.subr.mxu0 0.0
    %391 = vmatpush1.msra.mxu0 0.0
    %392 = vmatprep.subr.mxu0 0.0
    %393 = vmatpush1.msra.mxu0 0.0
    %394 = vmatprep.subr.mxu0 0.0
    %395 = vmatpush1.msra.mxu0 0.0
    %396 = vmatprep.subr.mxu0 0.0
    %397 = vmatpush1.msra.mxu0 0.0
    %398 = vmatprep.subr.mxu0 0.0
    %399 = vmatpush1.msra.mxu0 0.0
    %400 = vmatprep.subr.mxu0 0.0
    %401 = vmatpush1.msra.mxu0 0.0
    %402 = vmatprep.subr.mxu0 0.0
    %403 = vmatpush1.msra.mxu0 0.0
    %404 = vmatprep.subr.mxu0 0.0
    %405 = vmatpush1.msra.mxu0 0.0
    %406 = vmatprep.subr.mxu0 0.0
    %407 = vmatpush1.msra.mxu0 0.0
    %408 = vmatprep.subr.mxu0 0.0
    %409 = vmatpush1.msra.mxu0 0.0
    %410 = vmatprep.subr.mxu0 0.0
    %411 = vmatpush1.msra.mxu0 0.0
    %412 = vmatprep.subr.mxu0 0.0
    %413 = vmatpush1.msra.mxu0 0.0
    %414 = vmatprep.subr.mxu0 0.0
    %415 = vmatpush1.msra.mxu0 0.0
    %416 = vmatprep.mubr.f32.mxu0 0.0
    %417 = vmatmul.mubr.f32.gmra.mrb[0].mxu0 %v350
    %v418 = vpop.f32.mrb[0].mxu0
    %v419 = vadd.f32 %v347, %v418
    %v420 = vpop.f32.mrb[0].mxu0
    %421 = vdwg.mxu0
    %422 = vset.pattern.permute.xlu0 1
    %423 = vperm.xlu0 %422, %v337
    %v424 = vpop.permute.xlu0 %423
    %v426 = vlaneseq
    %v427 = vshrl.u32 %v426, 7
    %v428 = vsub.s32 5, %v427
    %v429 = vrot.slane %v21, %v428
    %v430 = vmul.f32 %v424, %v429
    %v431 = vadd.f32 %v419, %v430
    %432 = vset.pattern.permute.xlu0 2
    %433 = vperm.xlu0 %432, %v337
    %v434 = vpop.permute.xlu0 %433
    %v436 = vadd.f32 %v431, %v434
    %437 = vset.pattern.permute.xlu0 3
    %438 = vperm.xlu0 %437, %v337
    %v439 = vpop.permute.xlu0 %438
    %v441 = vmul.f32 %v439, %v21
    %v442 = vadd.f32 %v441, %v436
    %vm443 = vcmask 60416
    %444 = vst.msk [vmem:[#allocation2] sm:$0xf] %vm443, %v442
    // Predicated region
    $region22: #{tpu_custom_call.1} parent=1 // pred_check
      _
    $region23: #{tpu_custom_call.1} parent=1 // pred_check_branch
      %446 = sbr.rel (0) target = $region25
    $region24: #{tpu_custom_call.1} parent=1 // pred_region
      %s448 = ssub.s32 64, 64
      %449 = vsyncadd [#allocation3], %s448
      %s451 = sshll.u32 [#allocation2], 4
      %s452 = int_to_ptr.vmem [resolvable:$true] %s451
      %454 = dma.vmem_to_hbm [thread:$0]  %s452, 64, %s5, [#allocation3]
    $region25: #{tpu_custom_call.1} parent=1 // pred_fallthru
      _
    // Predicated region
    $region26: #{tpu_custom_call.1} parent=1 // pred_check
      _
    $region27: #{tpu_custom_call.1} parent=1 // pred_check_branch
      %456 = sbr.rel (0) target = $region29
    $region28: #{tpu_custom_call.1} parent=1 // pred_region
      %457 = dma.done [#allocation3], 64
    $region29: #{tpu_custom_call.1} parent=1 // pred_fallthru
      _
    %458 = vsyncpa [#allocation3], 1

</llo_original>
